<compile_context>
chip_gen: v6e
topology: v6e:2x2x1
jax: 0.10.0
libtpu: 0.0.40
codegen_flags: <defaults>
</compile_context>

<pallas_src>
import functools

import jax
import jax.numpy as jnp
from jax import lax
from jax.experimental import pallas as pl
from jax.experimental.pallas import tpu as pltpu


def _round_up(x: int, m: int) -> int:
    return ((x + m - 1) // m) * m


def _focal_loss_kernel(x_ref, t_ref, out_ref, *,
                       alpha: float, gamma: float, n_total: int, tile_n: int):
    # x_ref:   (tile_n, C) logits block (native dtype, cast in-kernel)
    # t_ref:   (tile_n, 1) int32 target class indices block
    # out_ref: (1, 1, 1)  f32 per-tile partial sum (one distinct block per step)
    i = pl.program_id(0)

    x = x_ref[...]                                        # native dtype
    targets = t_ref[...]                                  # (tile_n, 1) int32
    tn, c = x.shape

    logits = x.astype(jnp.float32)                        # (tile_n, C)
    m = jnp.max(logits, axis=-1, keepdims=True)           # (tile_n, 1)
    shifted = logits - m                                  # raw f32 cast dead after this
    sum_exp = jnp.sum(jnp.exp(shifted), axis=-1, keepdims=True)   # (tile_n, 1)

    # target logit via one-hot select (no gather on TPU); m cancels in ce:
    #   ce = (m + log(sum_exp)) - (m + shifted_t) = log(sum_exp) - shifted_t
    col_ids = lax.broadcasted_iota(jnp.int32, (tn, c), 1)
    onehot = col_ids == targets                           # bool (tile_n, C)
    shifted_t = jnp.sum(jnp.where(onehot, shifted, 0.0), axis=-1, keepdims=True)

    ce = jnp.log(sum_exp) - shifted_t                     # (tile_n, 1)
    pt = jnp.exp(-ce)
    om = jnp.maximum(1.0 - pt, 0.0)                       # clamp: fp rounding can give pt > 1

    # integer-gamma fast path: VPU multiplies instead of EUP pow (log+exp)
    g = float(gamma)
    if g == int(g) and 0 <= int(g) <= 8:
        w = jnp.ones_like(om)
        for _ in range(int(g)):
            w = w * om
    else:
        w = om ** jnp.float32(g)

    focal = jnp.float32(alpha) * w * ce                   # (tile_n, 1)

    # Mask padded tail rows BEFORE the cross-row sum (padded block contents are
    # undefined; where() does not propagate NaN from the unselected operand).
    row_ids = i * tile_n + lax.broadcasted_iota(jnp.int32, (tn, 1), 0)
    focal = jnp.where(row_ids < n_total, focal, 0.0)

    out_ref[...] = jnp.sum(focal).reshape(1, 1, 1)        # per-tile partial sum


def focal_loss(inputs: jax.Array, targets: jax.Array,
               alpha: float = 1.0, gamma: float = 2.0,
               reduction: str = "mean", tile_n: int | None = None) -> jax.Array:
    """Focal loss over the batch. inputs: (N, C) logits, targets: (N,) int class ids."""
    n, c = inputs.shape
    itemsize = jnp.dtype(inputs.dtype).itemsize
    c_lanes = max(_round_up(c, 128), 128)                 # last dim maps to 128-lane axis

    if tile_n is None:
        # Per-row VMEM accounting (all in bytes):
        #   2x double-buffered native-dtype input rows   : 2 * c_lanes * itemsize
        #   ~5 live full-tile f32/int32 temporaries      : 5 * c_lanes * 4
        #   targets (int32, lane-padded to 128, 2 bufs)  : 2 * 128 * 4
        # ~32 MiB accounting budget keeps us safely under the 48 MiB scoped limit
        # requested below (v7x physical VMEM is 64 MiB; v5e/v6e have 128 MiB).
        per_row = 2 * c_lanes * itemsize + 5 * c_lanes * 4 + 2 * 128 * 4
        budget_bytes = 32 * 1024 * 1024
        rows = max(8, (budget_bytes // per_row) // 8 * 8)
        tile_n = min(_round_up(n, 8), rows)
    num_tiles = pl.cdiv(n, tile_n)

    if reduction == "mean":
        divisor = float(n)
    elif reduction == "sum":
        divisor = 1.0
    else:
        raise NotImplementedError("reduction must be 'mean' or 'sum'")

    t2d = targets.astype(jnp.int32).reshape(n, 1)
    kernel = functools.partial(
        _focal_loss_kernel,
        alpha=float(alpha), gamma=float(gamma), n_total=n, tile_n=tile_n)

    partials = pl.pallas_call(
        kernel,
        out_shape=jax.ShapeDtypeStruct((num_tiles, 1, 1), jnp.float32),
        grid_spec=pltpu.PrefetchScalarGridSpec(
            num_scalar_prefetch=0,
            grid=(num_tiles,),
            in_specs=[
                pl.BlockSpec((tile_n, c), lambda i: (i, 0)),     # logits tile (native dtype)
                pl.BlockSpec((tile_n, 1), lambda i: (i, 0)),     # targets tile
            ],
            out_specs=pl.BlockSpec((1, 1, 1), lambda i: (i, 0, 0)),  # per-tile partial sum
        ),
        compiler_params=pltpu.CompilerParams(
            dimension_semantics=("parallel",),                  # tiles shard across TCs (v7x)
            vmem_limit_bytes=48 * 1024 * 1024),
    )(inputs, t2d)

    # Final reduce over num_tiles f32 partials + mean/sum scaling: plain JAX.
    return jnp.sum(partials) * jnp.float32(1.0 / divisor)


def _focal_loss_ref(inputs, targets, alpha=1.0, gamma=2.0, reduction="mean"):
    # pure-JAX reference matching PyTorch semantics
    logp = jax.nn.log_softmax(inputs.astype(jnp.float32), axis=-1)
    ce = -jnp.take_along_axis(logp, targets[:, None].astype(jnp.int32), axis=-1)[:, 0]
    pt = jnp.exp(-ce)
    fl = alpha * (1.0 - pt) ** gamma * ce
    return jnp.mean(fl) if reduction == "mean" else jnp.sum(fl)


if __name__ == "__main__":
    key = jax.random.PRNGKey(0)
    k1, k2, k3, k4, k5, k6 = jax.random.split(key, 6)

    # Test 1: small single-tile case (batch=8, classes=32), default alpha/gamma.
    N, C = 8, 32
    logits = jax.random.normal(k1, (N, C), dtype=jnp.float32) * 2.0
    targets = jax.random.randint(k2, (N,), 0, C, dtype=jnp.int32)
    out = jax.block_until_ready(focal_loss(logits, targets, alpha=1.0, gamma=2.0))
    ref = _focal_loss_ref(logits, targets, alpha=1.0, gamma=2.0)
    assert jnp.allclose(out, ref, atol=1e-5, rtol=1e-5), (out, ref)

    # Test 2: multi-tile with a masked tail (N=72 not a multiple of tile_n=32).
    N2, C2 = 72, 32
    logits2 = jax.random.normal(k3, (N2, C2), dtype=jnp.float32) * 2.0
    targets2 = jax.random.randint(k4, (N2,), 0, C2, dtype=jnp.int32)
    out2 = jax.block_until_ready(
        focal_loss(logits2, targets2, alpha=0.25, gamma=2.0, tile_n=32))
    ref2 = _focal_loss_ref(logits2, targets2, alpha=0.25, gamma=2.0)
    assert jnp.allclose(out2, ref2, atol=1e-5, rtol=1e-5), (out2, ref2)

    # Test 3: bf16 logits (in-kernel cast path), reduction='sum'.
    N3, C3 = 64, 32
    logits3 = (jax.random.normal(k5, (N3, C3), dtype=jnp.float32) * 2.0).astype(jnp.bfloat16)
    targets3 = jax.random.randint(k6, (N3,), 0, C3, dtype=jnp.int32)
    out3 = jax.block_until_ready(
        focal_loss(logits3, targets3, alpha=1.0, gamma=2.0, reduction="sum"))
    ref3 = _focal_loss_ref(logits3, targets3, alpha=1.0, gamma=2.0, reduction="sum")
    assert jnp.allclose(out3, ref3, atol=1e-3, rtol=1e-3), (out3, ref3)

    print("KERNEL_OK")
</pallas_src>

<mosaic_0001>
module attributes {stable_mosaic.version = 11 : i64} {
  func.func @_focal_loss_kernel(%arg0: i32, %arg1: memref<8x32xf32, #tpu.memory_space<vmem>>, %arg2: memref<8x1xi32, #tpu.memory_space<vmem>>, %arg3: memref<1x1x1xf32, #tpu.memory_space<vmem>>) attributes {dimension_semantics = [#tpu.dimension_semantics<parallel>], iteration_bounds = array<i64: 1>, scalar_prefetch = 0 : i64, scratch_operands = 0 : i64, tpu.core_type = #tpu.core_type<tc>, window_params = [{transform_indices = @transform_0, window_bounds = array<i64: 8, 32>}, {transform_indices = @transform_1, window_bounds = array<i64: 8, 1>}, {transform_indices = @transform_2, window_bounds = array<i64: 1, 1, 1>}]} {
    %c0 = arith.constant 0 : index
    %c0_0 = arith.constant 0 : index
    %0 = vector.load %arg1[%c0, %c0_0] : memref<8x32xf32, #tpu.memory_space<vmem>>, vector<8x32xf32>
    %c0_1 = arith.constant 0 : index
    %c0_2 = arith.constant 0 : index
    %1 = vector.load %arg2[%c0_1, %c0_2] : memref<8x1xi32, #tpu.memory_space<vmem>>, vector<8x1xi32>
    %cst = arith.constant dense<0xFF800000> : vector<8xf32>
    %2 = vector.multi_reduction <maximumf>, %0, %cst [1] : vector<8x32xf32> to vector<8xf32>
    %3 = vector.shape_cast %2 : vector<8xf32> to vector<8x1xf32>
    %4 = vector.broadcast %3 : vector<8x1xf32> to vector<8x32xf32>
    %5 = arith.subf %0, %4 : vector<8x32xf32>
    %6 = math.exp %5 : vector<8x32xf32>
    %cst_3 = arith.constant dense<0.000000e+00> : vector<8xf32>
    %7 = vector.multi_reduction <add>, %6, %cst_3 [1] : vector<8x32xf32> to vector<8xf32>
    %8 = vector.shape_cast %7 : vector<8xf32> to vector<8x1xf32>
    %9 = tpu.iota {dimensions = array<i32: 1>} : vector<8x32xi32>
    %10 = vector.broadcast %1 : vector<8x1xi32> to vector<8x32xi32>
    %11 = arith.cmpi eq, %9, %10 : vector<8x32xi32>
    %cst_4 = arith.constant 0.000000e+00 : f32
    %12 = vector.broadcast %cst_4 : f32 to vector<8x32xf32>
    %13 = arith.select %11, %5, %12 : vector<8x32xi1>, vector<8x32xf32>
    %cst_5 = arith.constant dense<0.000000e+00> : vector<8xf32>
    %14 = vector.multi_reduction <add>, %13, %cst_5 [1] : vector<8x32xf32> to vector<8xf32>
    %15 = vector.shape_cast %14 : vector<8xf32> to vector<8x1xf32>
    %16 = math.log %8 : vector<8x1xf32>
    %17 = arith.subf %16, %15 : vector<8x1xf32>
    %cst_6 = arith.constant 0.000000e+00 : f32
    %18 = vector.broadcast %cst_6 : f32 to vector<8x1xf32>
    %19 = arith.subf %18, %17 : vector<8x1xf32>
    %20 = math.exp %19 : vector<8x1xf32>
    %cst_7 = arith.constant 1.000000e+00 : f32
    %21 = vector.broadcast %cst_7 : f32 to vector<8x1xf32>
    %22 = arith.subf %21, %20 : vector<8x1xf32>
    %cst_8 = arith.constant 0.000000e+00 : f32
    %23 = vector.broadcast %cst_8 : f32 to vector<8x1xf32>
    %24 = arith.maximumf %22, %23 : vector<8x1xf32>
    %cst_9 = arith.constant 1.000000e+00 : f32
    %25 = vector.broadcast %cst_9 : f32 to vector<8x1xf32>
    %26 = arith.mulf %25, %24 : vector<8x1xf32>
    %27 = arith.mulf %26, %24 : vector<8x1xf32>
    %cst_10 = arith.constant 1.000000e+00 : f32
    %28 = vector.broadcast %cst_10 : f32 to vector<8x1xf32>
    %29 = arith.mulf %28, %27 : vector<8x1xf32>
    %30 = arith.mulf %29, %17 : vector<8x1xf32>
    %c8_i32 = arith.constant 8 : i32
    %31 = arith.muli %arg0, %c8_i32 : i32
    %32 = tpu.iota {dimensions = array<i32: 0>} : vector<8x1xi32>
    %33 = vector.broadcast %31 : i32 to vector<8x1xi32>
    %34 = arith.addi %33, %32 : vector<8x1xi32>
    %c8_i32_11 = arith.constant 8 : i32
    %35 = vector.broadcast %c8_i32_11 : i32 to vector<8x1xi32>
    %36 = arith.cmpi slt, %34, %35 : vector<8x1xi32>
    %cst_12 = arith.constant 0.000000e+00 : f32
    %37 = vector.broadcast %cst_12 : f32 to vector<8x1xf32>
    %38 = arith.select %36, %30, %37 : vector<8x1xi1>, vector<8x1xf32>
    %39 = vector.shape_cast %38 : vector<8x1xf32> to vector<1x8x1xf32>
    %cst_13 = arith.constant dense<0.000000e+00> : vector<1xf32>
    %40 = vector.multi_reduction <add>, %39, %cst_13 [1, 2] : vector<1x8x1xf32> to vector<1xf32>
    %41 = vector.shape_cast %40 : vector<1xf32> to vector<1x1x1xf32>
    %42 = vector.extract %41[0, 0, 0] : f32 from vector<1x1x1xf32>
    %43 = vector.broadcast %42 : f32 to vector<1x1x1xf32>
    %c0_14 = arith.constant 0 : index
    %c0_15 = arith.constant 0 : index
    %c0_16 = arith.constant 0 : index
    %44 = vector.load %arg3[%c0_14, %c0_15, %c0_16] : memref<1x1x1xf32, #tpu.memory_space<vmem>>, vector<1x1x1xf32>
    tpu.vector_store %arg3[%c0_14, %c0_15, %c0_16], %43 {strides = array<i32>} : memref<1x1x1xf32, #tpu.memory_space<vmem>>, vector<1x1x1xf32>,
    return
  }
  func.func @transform_0(%arg0: i32) -> (i32, i32) {
    %c0_i32 = arith.constant 0 : i32
    %c0_i32_0 = arith.constant 0 : i32
    return %arg0, %c0_i32 : i32, i32
  }
  func.func @transform_1(%arg0: i32) -> (i32, i32) {
    %c0_i32 = arith.constant 0 : i32
    %c0_i32_0 = arith.constant 0 : i32
    return %arg0, %c0_i32 : i32, i32
  }
  func.func @transform_2(%arg0: i32) -> (i32, i32, i32) {
    %c0_i32 = arith.constant 0 : i32
    %c0_i32_0 = arith.constant 0 : i32
    %c0_i32_1 = arith.constant 0 : i32
    return %arg0, %c0_i32, %c0_i32_0 : i32, i32, i32
  }
}

</mosaic_0001>

<llo_original>
// kernel: tpu_custom_call.1
$region0: #{tpu_custom_call.1}
  #allocation0 [shape = 'u32[]', space=smem, size = 0x4, offset = 0x4, fixed_abs, tag = 'smem constant byte address 0x4 - core index']
  #allocation1 [shape = 'u32[144,128]{1,0:T(1,128)}', space=vmem, size = 0x12000, scoped, tag = 'internal scratch']
  %s0 = inlined_call_operand.vmem [shape: f32[8,32], index: 0, kind: input, shape index: {}]
  %s1 = inlined_call_operand.vmem [shape: s32[8,1], index: 1, kind: input, shape index: {}]
  %s2 = inlined_call_operand.hbm [shape: f32[1,1,1], index: 2, kind: output, shape index: {}]
  %s3 = sld [smem:[#allocation0]]
  $region18: #{tpu_custom_call.1} parent=0
    _
  %s5 = ssub.s32 1, %s3
  %s6 = scalar_select 0, %s5, %s3
  $region1: #{tpu_custom_call.1} parent=0
    #allocation2 [shape = 'u8[512]{0}', space=vmem, size = 0x400, scoped, tag = 'output window, operand 0, single buffered']
    #allocation3 [shape = 's32[1]{0}', space=sflag, size = 0x4, scoped, tag = 'scoped memory for tpu_custom_call.1']
    %7 = vsyncpa [#allocation3], 0
    // Predicated region
    $region2: #{tpu_custom_call.1} parent=1 // pred_check
      _
    $region3: #{tpu_custom_call.1} parent=1 // pred_check_branch
      %9 = sbr.rel (0) target = $region5
    $region4: #{tpu_custom_call.1} parent=1 // pred_region
      _
    $region5: #{tpu_custom_call.1} parent=1 // pred_fallthru
      _
    // Predicated region
    $region6: #{tpu_custom_call.1} parent=1 // pred_check
      _
    $region7: #{tpu_custom_call.1} parent=1 // pred_check_branch
      %11 = sbr.rel (0) target = $region9
    $region8: #{tpu_custom_call.1} parent=1 // pred_region
      _
    $region9: #{tpu_custom_call.1} parent=1 // pred_fallthru
      _
    %v12 = vld [vmem:[%s0] sm:$0xff]
    %v13 = vld [vmem:[%s1] sm:$0xff]
    %vm14 = vcmask 261120
    %v15 = vsel %vm14, %v12, -inf
    %16 = vmax.xlane.f32.xlu0 %v15
    %v17 = vpop.xlane.xlu0 %16
    %v18 = vsub.f32 %v12, %v17
    %v19 = vmul.f32 %v18, 1.442695
    %v20 = vpow.pop %v19
    %v21 = vsel %vm14, %v20, 0.0
    %22 = vadd.xlane.f32.xlu0 %v21
    %v23 = vpop.xlane.xlu0 %22
    %v24 = vlaneseq
    %v25 = vand.u32 %v24, 127
    %26 = vset.pattern.permute.xlu0 0
    %27 = vperm.xlu0 %26, %v13
    %v28 = vpop.permute.xlu0 %27
    %vm29 = vcmp.eq.s32.totalorder %v25, %v28
    %v30 = vsel %vm29, %v18, 0.0
    %v31 = vsel %vm14, %v30, 0.0
    %32 = vadd.xlane.f32.xlu0 %v31
    %v33 = vpop.xlane.xlu0 %32
    %v34 = vlog2.pop %v23
    %v35 = vmul.f32 %v34, 0.6931472
    %v36 = vsub.f32 %v35, %v33
    %v37 = vsub.f32 0.0, %v36
    %v38 = vmul.f32 %v37, 1.442695
    %v39 = vpow.pop %v38
    %v40 = vsub.f32 1.0, %v39
    %v41 = vmax.f32 %v40, 0.0
    %v42 = vmul.f32 %v41, %v41
    %v43 = vmul.f32 %v42, %v36
    %s44 = smul.u32 0, 8
    %v45 = vlaneseq
    %v46 = vshrl.u32 %v45, 7
    %v47 = vstv %s44
    %v48 = vadd.s32 %v47, %v46
    %vm49 = vcmp.lt.s32.totalorder %v48, 8
    %v50 = vsel %vm49, %v43, 0.0
    %vm51 = vcmask 7168
    %v52 = vsel %vm51, %v50, 0.0
    %53 = vadd.xlane.f32.xlu0 %v52
    %v54 = vpop.xlane.xlu0 %53
    %v55 = vrot.slane %v54, 4
    %v56 = vadd.f32 %v54, %v55
    %v57 = vrot.slane %v56, 2
    %v58 = vadd.f32 %v56, %v57
    %v59 = vrot.slane %v58, 1
    %v60 = vadd.f32 %v58, %v59
    %s61 = vtos %v60
    %v62 = vstv %s61
    %vm63 = vcmask 0
    %64 = vst.msk [vmem:[#allocation2] sm:$0x1] %vm63, %v62
    // Predicated region
    $region10: #{tpu_custom_call.1} parent=1 // pred_check
      _
    $region11: #{tpu_custom_call.1} parent=1 // pred_check_branch
      %66 = sbr.rel (0) target = $region13
    $region12: #{tpu_custom_call.1} parent=1 // pred_region
      %s68 = ssub.s32 16, 16
      %69 = vsyncadd [#allocation3], %s68
      %s71 = sshll.u32 [#allocation2], 4
      %s72 = int_to_ptr.vmem [resolvable:$true] %s71
      %74 = dma.vmem_to_hbm [thread:$0]  %s72, 16, %s2, [#allocation3]
    $region13: #{tpu_custom_call.1} parent=1 // pred_fallthru
      _
    // Predicated region
    $region14: #{tpu_custom_call.1} parent=1 // pred_check
      _
    $region15: #{tpu_custom_call.1} parent=1 // pred_check_branch
      %76 = sbr.rel (0) target = $region17
    $region16: #{tpu_custom_call.1} parent=1 // pred_region
      %77 = dma.done [#allocation3], 16
    $region17: #{tpu_custom_call.1} parent=1 // pred_fallthru
      _
    %78 = vsyncpa [#allocation3], 1

</llo_original>
